<compile_context>
chip_gen: v7x
topology: tpu7x:2x2x1
jax: 0.10.0
libtpu: 0.0.40
codegen_flags: <defaults>
</compile_context>

<pallas_src>
import jax
import jax.numpy as jnp
from jax.experimental import pallas as pl
from jax.experimental.pallas import tpu as pltpu

LANE = 128  # TPU lane width (last-dim vreg width)


def _mlp_kernel(xT_ref, w1t_ref, b1t_ref, w2t_ref, b2t_ref, wot_ref, bot_ref,
                oT_ref):
    """Whole MLP forward for one batch tile, entirely in VMEM.

    Everything is in (feature, batch) layout: batch on the lane axis, so all
    loads/stores are lane-dense and the output needs no padding. Matmuls hit
    the MXU (f32 accumulation); bias add (lane-broadcast from column 0) and
    ReLU run on the VPU.
    """
    h = xT_ref[...]                                                    # (D_in, TB)
    h = jnp.maximum(
        jnp.dot(w1t_ref[...], h, preferred_element_type=jnp.float32) + b1t_ref[...],
        0.0)                                                           # (H, TB)
    h = jnp.maximum(
        jnp.dot(w2t_ref[...], h, preferred_element_type=jnp.float32) + b2t_ref[...],
        0.0)                                                           # (H, TB)
    y = jnp.dot(wot_ref[...], h, preferred_element_type=jnp.float32) + bot_ref[...]
    oT_ref[...] = y.astype(oT_ref.dtype)                               # (D_out, TB)


def _num_tensorcores():
    """Best-effort TensorCores-per-chip (2 on v7x, 1 on v5e/v6e)."""
    try:
        info = pltpu.get_tpu_info()
        for attr in ("num_cores", "core_count", "num_tensorcores"):
            v = getattr(info, attr, None)
            if isinstance(v, int) and v > 0:
                return v
    except Exception:
        pass
    try:
        dev = jax.devices()[0]
        v = getattr(dev, "num_cores", None)
        if isinstance(v, int) and v > 0:
            return v
        if "v7" in str(getattr(dev, "device_kind", "")).lower():
            return 2
    except Exception:
        pass
    return 1


def _choose_batch_tile(B, num_cores):
    """Pick the batch (lane-axis) tile.

    Tiles must be a multiple of 128 (lane constraint) or the full batch.
    Cap at 512: even then the live activation set is only a handful of vregs
    in (feature, batch) layout, and smaller tiles give the BlockSpec pipeline
    enough steps to overlap DMA with compute.  Dual-core chips get >=4 steps
    per core when the batch permits; single-core chips just want >=3 steps
    for double-buffering.
    """
    if B % LANE != 0:
        return B  # single full-batch tile (lane dim == full array dim is legal)
    candidates = [tb for tb in (512, 256, 128) if B % tb == 0]
    target_steps = 4 * num_cores if num_cores > 1 else 3
    for tb in candidates:                      # largest tile meeting the step target
        if B // tb >= target_steps:
            return tb
    for tb in candidates:                      # else at least one step per core
        if B // tb >= num_cores:
            return tb
    return candidates[-1] if candidates else B


@jax.jit
def classical_model_forward(x, prep):
    """Run ClassicalModel forward via a single fused Pallas kernel.

    x:    (B, input_dim) float32
    prep: prepared (transposed) params from `prepare_params`:
          w1t (H, D_in), b1t (H, 1), w2t (H, H), b2t (H, 1),
          wot (D_out, H), bot (D_out, 1)
    Returns (B, output_dim) float32.
    """
    B, d_in = x.shape
    d_out = prep["wot"].shape[0]

    xT = x.T  # (d_in, B): feature-major so tile DMAs are contiguous, lane-dense

    tb = _choose_batch_tile(B, _num_tensorcores())
    assert B % tb == 0
    grid = (B // tb,)

    # Constant weights/biases: whole-array VMEM residents (loaded once, not
    # re-pipelined / double-buffered every grid step).
    resident = pl.BlockSpec(memory_space=pltpu.MemorySpace.VMEM)

    yT = pl.pallas_call(
        _mlp_kernel,
        out_shape=jax.ShapeDtypeStruct((d_out, B), x.dtype),
        grid=grid,
        in_specs=[
            pl.BlockSpec((d_in, tb), lambda i: (0, i)),   # x^T tile (pipelined)
            resident,                                     # w1^T
            resident,                                     # b1 (H, 1)
            resident,                                     # w2^T
            resident,                                     # b2 (H, 1)
            resident,                                     # wo^T
            resident,                                     # bo (D_out, 1)
        ],
        out_specs=pl.BlockSpec((d_out, tb), lambda i: (0, i)),
        compiler_params=pltpu.CompilerParams(
            dimension_semantics=("parallel",),
        ),
    )(xT, prep["w1t"], prep["b1t"], prep["w2t"], prep["b2t"],
      prep["wot"], prep["bot"])

    return yT.T  # (B, d_out)


def init_params(key, input_dim, hidden_dim, output_dim):
    """Deterministic init mimicking PyTorch nn.Linear (uniform +/- 1/sqrt(fan_in))."""
    ks = jax.random.split(key, 6)

    def linear(kw, kb, fan_in, fan_out):
        bound = 1.0 / jnp.sqrt(fan_in)
        w = jax.random.uniform(kw, (fan_in, fan_out), jnp.float32, -bound, bound)
        b = jax.random.uniform(kb, (1, fan_out), jnp.float32, -bound, bound)
        return w, b

    w1, b1 = linear(ks[0], ks[1], input_dim, hidden_dim)
    w2, b2 = linear(ks[2], ks[3], hidden_dim, hidden_dim)
    wo, bo = linear(ks[4], ks[5], hidden_dim, output_dim)
    return dict(w1=w1, b1=b1, w2=w2, b2=b2, wo=wo, bo=bo)


def prepare_params(p):
    """One-time weight prep for the feature-major kernel (hoisted out of the
    per-call path): transpose weights to (out, in) and biases to (out, 1)."""
    return dict(
        w1t=jnp.asarray(p["w1"].T),  b1t=jnp.asarray(p["b1"].T),
        w2t=jnp.asarray(p["w2"].T),  b2t=jnp.asarray(p["b2"].T),
        wot=jnp.asarray(p["wo"].T),  bot=jnp.asarray(p["bo"].T),
    )


def reference_forward(x, p):
    """Pure-JAX reference of the same forward pass."""
    h = jnp.maximum(x @ p["w1"] + p["b1"], 0.0)
    h = jnp.maximum(h @ p["w2"] + p["b2"], 0.0)
    return h @ p["wo"] + p["bo"]


if __name__ == "__main__":
    INPUT_DIM = 8
    HIDDEN_DIM = 8   # == INPUT_DIM so the stacked classical layers compose
    OUTPUT_DIM = 2
    BATCH = 512      # multiple of 128 -> lane-dense batch tiles

    key = jax.random.PRNGKey(0)
    k_x, k_p = jax.random.split(key)

    x = jax.random.normal(k_x, (BATCH, INPUT_DIM), dtype=jnp.float32)
    params = init_params(k_p, INPUT_DIM, HIDDEN_DIM, OUTPUT_DIM)
    prep = jax.block_until_ready(prepare_params(params))  # hoisted, done once

    y = classical_model_forward(x, prep)
    y = jax.block_until_ready(y)

    y_ref = reference_forward(x, params)
    assert y.shape == (BATCH, OUTPUT_DIM)
    assert jnp.allclose(y, y_ref, atol=1e-5, rtol=1e-5), "mismatch vs JAX reference"

    print("KERNEL_OK")
</pallas_src>

<mosaic_0001>
module attributes {stable_mosaic.version = 11 : i64} {
  func.func @_mlp_kernel(%arg0: i32, %arg1: memref<8x128xf32, #tpu.memory_space<vmem>>, %arg2: memref<8x8xf32, #tpu.memory_space<vmem>>, %arg3: memref<8x1xf32, #tpu.memory_space<vmem>>, %arg4: memref<8x8xf32, #tpu.memory_space<vmem>>, %arg5: memref<8x1xf32, #tpu.memory_space<vmem>>, %arg6: memref<2x8xf32, #tpu.memory_space<vmem>>, %arg7: memref<2x1xf32, #tpu.memory_space<vmem>>, %arg8: memref<2x128xf32, #tpu.memory_space<vmem>>) attributes {dimension_semantics = [#tpu.dimension_semantics<parallel>], iteration_bounds = array<i64: 4>, scalar_prefetch = 0 : i64, scratch_operands = 0 : i64, tpu.core_type = #tpu.core_type<tc>, window_params = [{transform_indices = @transform_0, window_bounds = array<i64: 8, 128>}, {pipeline_mode = #tpu.pipeline_mode<synchronous>, transform_indices = @transform_1, window_bounds = array<i64: 8, 8>}, {pipeline_mode = #tpu.pipeline_mode<synchronous>, transform_indices = @transform_2, window_bounds = array<i64: 8, 1>}, {pipeline_mode = #tpu.pipeline_mode<synchronous>, transform_indices = @transform_3, window_bounds = array<i64: 8, 8>}, {pipeline_mode = #tpu.pipeline_mode<synchronous>, transform_indices = @transform_4, window_bounds = array<i64: 8, 1>}, {pipeline_mode = #tpu.pipeline_mode<synchronous>, transform_indices = @transform_5, window_bounds = array<i64: 2, 8>}, {pipeline_mode = #tpu.pipeline_mode<synchronous>, transform_indices = @transform_6, window_bounds = array<i64: 2, 1>}, {transform_indices = @transform_7, window_bounds = array<i64: 2, 128>}]} {
    %c0 = arith.constant 0 : index
    %c0_0 = arith.constant 0 : index
    %0 = vector.load %arg1[%c0, %c0_0] : memref<8x128xf32, #tpu.memory_space<vmem>>, vector<8x128xf32>
    %c0_1 = arith.constant 0 : index
    %c0_2 = arith.constant 0 : index
    %1 = vector.load %arg2[%c0_1, %c0_2] : memref<8x8xf32, #tpu.memory_space<vmem>>, vector<8x8xf32>
    %cst = arith.constant dense<0.000000e+00> : vector<8x128xf32>
    %2 = tpu.matmul %1, %0, %cst {dimension_numbers = #tpu.dot_dimension_numbers<[1], [0], [0], [1], [0, 0, 1, 1], [], []>} : vector<8x8xf32>, vector<8x128xf32>, vector<8x128xf32> -> vector<8x128xf32>
    %c0_3 = arith.constant 0 : index
    %c0_4 = arith.constant 0 : index
    %3 = vector.load %arg3[%c0_3, %c0_4] : memref<8x1xf32, #tpu.memory_space<vmem>>, vector<8x1xf32>
    %4 = vector.broadcast %3 : vector<8x1xf32> to vector<8x128xf32>
    %5 = arith.addf %2, %4 : vector<8x128xf32>
    %cst_5 = arith.constant 0.000000e+00 : f32
    %6 = vector.broadcast %cst_5 : f32 to vector<8x128xf32>
    %7 = arith.maximumf %5, %6 : vector<8x128xf32>
    %c0_6 = arith.constant 0 : index
    %c0_7 = arith.constant 0 : index
    %8 = vector.load %arg4[%c0_6, %c0_7] : memref<8x8xf32, #tpu.memory_space<vmem>>, vector<8x8xf32>
    %cst_8 = arith.constant dense<0.000000e+00> : vector<8x128xf32>
    %9 = tpu.matmul %8, %7, %cst_8 {dimension_numbers = #tpu.dot_dimension_numbers<[1], [0], [0], [1], [0, 0, 1, 1], [], []>} : vector<8x8xf32>, vector<8x128xf32>, vector<8x128xf32> -> vector<8x128xf32>
    %c0_9 = arith.constant 0 : index
    %c0_10 = arith.constant 0 : index
    %10 = vector.load %arg5[%c0_9, %c0_10] : memref<8x1xf32, #tpu.memory_space<vmem>>, vector<8x1xf32>
    %11 = vector.broadcast %10 : vector<8x1xf32> to vector<8x128xf32>
    %12 = arith.addf %9, %11 : vector<8x128xf32>
    %cst_11 = arith.constant 0.000000e+00 : f32
    %13 = vector.broadcast %cst_11 : f32 to vector<8x128xf32>
    %14 = arith.maximumf %12, %13 : vector<8x128xf32>
    %c0_12 = arith.constant 0 : index
    %c0_13 = arith.constant 0 : index
    %15 = vector.load %arg6[%c0_12, %c0_13] : memref<2x8xf32, #tpu.memory_space<vmem>>, vector<2x8xf32>
    %cst_14 = arith.constant dense<0.000000e+00> : vector<2x128xf32>
    %16 = tpu.matmul %15, %14, %cst_14 {dimension_numbers = #tpu.dot_dimension_numbers<[1], [0], [0], [1], [0, 0, 1, 1], [], []>} : vector<2x8xf32>, vector<8x128xf32>, vector<2x128xf32> -> vector<2x128xf32>
    %c0_15 = arith.constant 0 : index
    %c0_16 = arith.constant 0 : index
    %17 = vector.load %arg7[%c0_15, %c0_16] : memref<2x1xf32, #tpu.memory_space<vmem>>, vector<2x1xf32>
    %18 = vector.broadcast %17 : vector<2x1xf32> to vector<2x128xf32>
    %19 = arith.addf %16, %18 : vector<2x128xf32>
    %c0_17 = arith.constant 0 : index
    %c0_18 = arith.constant 0 : index
    %20 = vector.load %arg8[%c0_17, %c0_18] : memref<2x128xf32, #tpu.memory_space<vmem>>, vector<2x128xf32>
    tpu.vector_store %arg8[%c0_17, %c0_18], %19 {strides = array<i32>} : memref<2x128xf32, #tpu.memory_space<vmem>>, vector<2x128xf32>,
    return
  }
  func.func @transform_0(%arg0: i32) -> (i32, i32) {
    %c0_i32 = arith.constant 0 : i32
    %c0_i32_0 = arith.constant 0 : i32
    return %c0_i32, %arg0 : i32, i32
  }
  func.func @transform_1(%arg0: i32) -> (i32, i32) {
    %c0_i32 = arith.constant 0 : i32
    %c0_i32_0 = arith.constant 0 : i32
    %c0_i32_1 = arith.constant 0 : i32
    return %c0_i32, %c0_i32_0 : i32, i32
  }
  func.func @transform_2(%arg0: i32) -> (i32, i32) {
    %c0_i32 = arith.constant 0 : i32
    %c0_i32_0 = arith.constant 0 : i32
    %c0_i32_1 = arith.constant 0 : i32
    return %c0_i32, %c0_i32_0 : i32, i32
  }
  func.func @transform_3(%arg0: i32) -> (i32, i32) {
    %c0_i32 = arith.constant 0 : i32
    %c0_i32_0 = arith.constant 0 : i32
    %c0_i32_1 = arith.constant 0 : i32
    return %c0_i32, %c0_i32_0 : i32, i32
  }
  func.func @transform_4(%arg0: i32) -> (i32, i32) {
    %c0_i32 = arith.constant 0 : i32
    %c0_i32_0 = arith.constant 0 : i32
    %c0_i32_1 = arith.constant 0 : i32
    return %c0_i32, %c0_i32_0 : i32, i32
  }
  func.func @transform_5(%arg0: i32) -> (i32, i32) {
    %c0_i32 = arith.constant 0 : i32
    %c0_i32_0 = arith.constant 0 : i32
    %c0_i32_1 = arith.constant 0 : i32
    return %c0_i32, %c0_i32_0 : i32, i32
  }
  func.func @transform_6(%arg0: i32) -> (i32, i32) {
    %c0_i32 = arith.constant 0 : i32
    %c0_i32_0 = arith.constant 0 : i32
    %c0_i32_1 = arith.constant 0 : i32
    return %c0_i32, %c0_i32_0 : i32, i32
  }
  func.func @transform_7(%arg0: i32) -> (i32, i32) {
    %c0_i32 = arith.constant 0 : i32
    %c0_i32_0 = arith.constant 0 : i32
    return %c0_i32, %arg0 : i32, i32
  }
}

</mosaic_0001>

<llo_original>
// kernel: classical_model_forward.1
$region0: #{classical_model_forward.1}
  #allocation0 [shape = 'u32[]', space=smem, size = 0x4, offset = 0x4, fixed_abs, tag = 'smem constant byte address 0x4 - core index']
  #allocation1 [shape = 'u32[144,128]{1,0:T(1,128)}', space=vmem, size = 0x12000, scoped, tag = 'internal scratch']
  %s0 = inlined_call_operand.hbm [shape: f32[8,512], index: 0, kind: input, shape index: {}]
  %s1 = inlined_call_operand.vmem [shape: f32[8,8], index: 1, kind: input, shape index: {}]
  %s2 = inlined_call_operand.vmem [shape: f32[8,1], index: 2, kind: input, shape index: {}]
  %s3 = inlined_call_operand.vmem [shape: f32[8,8], index: 3, kind: input, shape index: {}]
  %s4 = inlined_call_operand.vmem [shape: f32[8,1], index: 4, kind: input, shape index: {}]
  %s5 = inlined_call_operand.vmem [shape: f32[2,8], index: 5, kind: input, shape index: {}]
  %s6 = inlined_call_operand.vmem [shape: f32[2,1], index: 6, kind: input, shape index: {}]
  %s7 = inlined_call_operand.hbm [shape: f32[2,512], index: 7, kind: output, shape index: {}]
  %s8 = sld [smem:[#allocation0]]
  $region65: #{classical_model_forward.1} parent=0
    _
  %s10 = ssub.s32 1, %s8
  %s11 = scalar_select 0, %s10, %s8
  $region1: #{classical_model_forward.1} parent=0
    #allocation2 [shape = 'u8[8192]{0}', space=vmem, size = 0x2000, scoped, tag = 'input window, operand 0']
    #allocation3 [shape = 's32[2]{0}', space=sflag, size = 0x8, scoped, tag = 'scoped memory for classical_model_forward.1']
    #allocation4 [shape = 's32[2]{0}', space=sflag, size = 0x8, scoped, tag = 'scoped memory for classical_model_forward.1']
    #allocation5 [shape = 'u8[2048]{0}', space=vmem, size = 0x800, scoped, tag = 'output window, operand 0']
    %12 = vsyncpa [#allocation3], 0
    %s13 = scalar_lea.sflag [#allocation3], 1
    %14 = vsyncpa %s13, 0
    %15 = vsyncpa [#allocation4], 0
    %s16 = scalar_lea.sflag [#allocation4], 1
    %17 = vsyncpa %s16, 0
    loop: start=0, step=1, limit=6
    $region2: #{classical_model_forward.1} parent=1 // loop_pre_header
      _
    $region3: #{classical_model_forward.1} parent=1 // loop_header
      %s19 = sphi 0, %s23
      %p20 = scmp.ge.s32.totalorder %s19, 6
      %s29 = sphi 0, %s31
      %s32 = sphi 0, %s29
      %s33 = sphi 0, %s32
      %s49 = sphi 0, %s33
      %s53 = sphi 0, %s53
      %s55 = sphi 0, %s53
      %s56 = sphi 0, %s55
      %s70 = sphi 0, %s56
      %s74 = sphi 0, %s74
      %s76 = sphi 0, %s74
      %s77 = sphi 0, %s76
      %s91 = sphi 0, %s77
      %s95 = sphi 0, %s95
      %s97 = sphi 0, %s95
      %s98 = sphi 0, %s97
      %s112 = sphi 0, %s98
      %s116 = sphi 0, %s116
      %s118 = sphi 0, %s116
      %s119 = sphi 0, %s118
      %s133 = sphi 0, %s119
      %s137 = sphi 0, %s137
      %s139 = sphi 0, %s137
      %s140 = sphi 0, %s139
      %s154 = sphi 0, %s140
      %s158 = sphi 0, %s158
      %s160 = sphi 0, %s158
      %s161 = sphi 0, %s160
      %s175 = sphi 0, %s161
      %s181 = sphi 0, %s183
      %s184 = sphi 0, %s181
      %s185 = sphi 0, %s184
      %s201 = sphi 0, %s185
    $region4: #{classical_model_forward.1} parent=1 // loop_header_branch
      %22 = sbr.rel (%p20) target = $region8
    $region5: #{classical_model_forward.1} parent=1 // loop_body
      %s24 = ssub.s32 %s19, 1
      %s25 = ssub.s32 %s19, 2
      %s26 = sadd.s32 %s19, 1
      %s27 = ssub.s32 %s19, %s26
      %p28 = scmp.eq.s32.totalorder %s27, 0
      %s30 = sadd.s32 %s29, 1
      %s31 = scalar_select %p28, %s29, %s30
      %p34 = pneg %p28
      %p35 = scmp.eq.s32.totalorder %s19, 3
      %p36 = por %p34, %p35
      %p37 = scmp.ne.s32.totalorder %s29, %s32
      %p38 = scmp.eq.s32.totalorder %s19, 0
      %p39 = por %p37, %p38
      %p40 = scmp.ne.s32.totalorder %s29, %s32
      %p41 = scmp.eq.s32.totalorder %s24, 3
      %p42 = por %p40, %p41
      %p43 = scmp.ne.s32.totalorder %s32, %s33
      %p44 = scmp.eq.s32.totalorder %s24, 0
      %p45 = por %p43, %p44
      %p46 = scmp.ne.s32.totalorder %s32, %s33
      %p47 = scmp.eq.s32.totalorder %s25, 3
      %p48 = por %p46, %p47
      %p50 = scmp.ne.s32.totalorder %s33, %s49
      %p51 = scmp.eq.s32.totalorder %s25, 0
      %p52 = por %p50, %p51
      %s54 = sadd.s32 %s53, 1
      %p57 = scmp.eq.s32.totalorder %s19, 3
      %p58 = scmp.ne.s32.totalorder %s53, %s55
      %p59 = scmp.eq.s32.totalorder %s19, 0
      %p60 = por %p58, %p59
      %p61 = scmp.ne.s32.totalorder %s53, %s55
      %p62 = scmp.eq.s32.totalorder %s24, 3
      %p63 = por %p61, %p62
      %p64 = scmp.ne.s32.totalorder %s55, %s56
      %p65 = scmp.eq.s32.totalorder %s24, 0
      %p66 = por %p64, %p65
      %p67 = scmp.ne.s32.totalorder %s55, %s56
      %p68 = scmp.eq.s32.totalorder %s25, 3
      %p69 = por %p67, %p68
      %p71 = scmp.ne.s32.totalorder %s56, %s70
      %p72 = scmp.eq.s32.totalorder %s25, 0
      %p73 = por %p71, %p72
      %s75 = sadd.s32 %s74, 1
      %p78 = scmp.eq.s32.totalorder %s19, 3
      %p79 = scmp.ne.s32.totalorder %s74, %s76
      %p80 = scmp.eq.s32.totalorder %s19, 0
      %p81 = por %p79, %p80
      %p82 = scmp.ne.s32.totalorder %s74, %s76
      %p83 = scmp.eq.s32.totalorder %s24, 3
      %p84 = por %p82, %p83
      %p85 = scmp.ne.s32.totalorder %s76, %s77
      %p86 = scmp.eq.s32.totalorder %s24, 0
      %p87 = por %p85, %p86
      %p88 = scmp.ne.s32.totalorder %s76, %s77
      %p89 = scmp.eq.s32.totalorder %s25, 3
      %p90 = por %p88, %p89
      %p92 = scmp.ne.s32.totalorder %s77, %s91
      %p93 = scmp.eq.s32.totalorder %s25, 0
      %p94 = por %p92, %p93
      %s96 = sadd.s32 %s95, 1
      %p99 = scmp.eq.s32.totalorder %s19, 3
      %p100 = scmp.ne.s32.totalorder %s95, %s97
      %p101 = scmp.eq.s32.totalorder %s19, 0
      %p102 = por %p100, %p101
      %p103 = scmp.ne.s32.totalorder %s95, %s97
      %p104 = scmp.eq.s32.totalorder %s24, 3
      %p105 = por %p103, %p104
      %p106 = scmp.ne.s32.totalorder %s97, %s98
      %p107 = scmp.eq.s32.totalorder %s24, 0
      %p108 = por %p106, %p107
      %p109 = scmp.ne.s32.totalorder %s97, %s98
      %p110 = scmp.eq.s32.totalorder %s25, 3
      %p111 = por %p109, %p110
      %p113 = scmp.ne.s32.totalorder %s98, %s112
      %p114 = scmp.eq.s32.totalorder %s25, 0
      %p115 = por %p113, %p114
      %s117 = sadd.s32 %s116, 1
      %p120 = scmp.eq.s32.totalorder %s19, 3
      %p121 = scmp.ne.s32.totalorder %s116, %s118
      %p122 = scmp.eq.s32.totalorder %s19, 0
      %p123 = por %p121, %p122
      %p124 = scmp.ne.s32.totalorder %s116, %s118
      %p125 = scmp.eq.s32.totalorder %s24, 3
      %p126 = por %p124, %p125
      %p127 = scmp.ne.s32.totalorder %s118, %s119
      %p128 = scmp.eq.s32.totalorder %s24, 0
      %p129 = por %p127, %p128
      %p130 = scmp.ne.s32.totalorder %s118, %s119
      %p131 = scmp.eq.s32.totalorder %s25, 3
      %p132 = por %p130, %p131
      %p134 = scmp.ne.s32.totalorder %s119, %s133
      %p135 = scmp.eq.s32.totalorder %s25, 0
      %p136 = por %p134, %p135
      %s138 = sadd.s32 %s137, 1
      %p141 = scmp.eq.s32.totalorder %s19, 3
      %p142 = scmp.ne.s32.totalorder %s137, %s139
      %p143 = scmp.eq.s32.totalorder %s19, 0
      %p144 = por %p142, %p143
      %p145 = scmp.ne.s32.totalorder %s137, %s139
      %p146 = scmp.eq.s32.totalorder %s24, 3
      %p147 = por %p145, %p146
      %p148 = scmp.ne.s32.totalorder %s139, %s140
      %p149 = scmp.eq.s32.totalorder %s24, 0
      %p150 = por %p148, %p149
      %p151 = scmp.ne.s32.totalorder %s139, %s140
      %p152 = scmp.eq.s32.totalorder %s25, 3
      %p153 = por %p151, %p152
      %p155 = scmp.ne.s32.totalorder %s140, %s154
      %p156 = scmp.eq.s32.totalorder %s25, 0
      %p157 = por %p155, %p156
      %s159 = sadd.s32 %s158, 1
      %p162 = scmp.eq.s32.totalorder %s19, 3
      %p163 = scmp.ne.s32.totalorder %s158, %s160
      %p164 = scmp.eq.s32.totalorder %s19, 0
      %p165 = por %p163, %p164
      %p166 = scmp.ne.s32.totalorder %s158, %s160
      %p167 = scmp.eq.s32.totalorder %s24, 3
      %p168 = por %p166, %p167
      %p169 = scmp.ne.s32.totalorder %s160, %s161
      %p170 = scmp.eq.s32.totalorder %s24, 0
      %p171 = por %p169, %p170
      %p172 = scmp.ne.s32.totalorder %s160, %s161
      %p173 = scmp.eq.s32.totalorder %s25, 3
      %p174 = por %p172, %p173
      %p176 = scmp.ne.s32.totalorder %s161, %s175
      %p177 = scmp.eq.s32.totalorder %s25, 0
      %p178 = por %p176, %p177
      %s179 = ssub.s32 %s19, %s26
      %p180 = scmp.eq.s32.totalorder %s179, 0
      %s182 = sadd.s32 %s181, 1
      %s183 = scalar_select %p180, %s181, %s182
      %p186 = pneg %p180
      %p187 = scmp.eq.s32.totalorder %s19, 3
      %p188 = por %p186, %p187
      %p189 = scmp.ne.s32.totalorder %s181, %s184
      %p190 = scmp.eq.s32.totalorder %s19, 0
      %p191 = por %p189, %p190
      %p192 = scmp.ne.s32.totalorder %s181, %s184
      %p193 = scmp.eq.s32.totalorder %s24, 3
      %p194 = por %p192, %p193
      %p195 = scmp.ne.s32.totalorder %s184, %s185
      %p196 = scmp.eq.s32.totalorder %s24, 0
      %p197 = por %p195, %p196
      %p198 = scmp.ne.s32.totalorder %s184, %s185
      %p199 = scmp.eq.s32.totalorder %s25, 3
      %p200 = por %p198, %p199
      %p202 = scmp.ne.s32.totalorder %s185, %s201
      %p203 = scmp.eq.s32.totalorder %s25, 0
      %p204 = por %p202, %p203
      %p205 = scmp.le.s32.totalorder 1, %s19
      %p206 = scmp.lt.s32.totalorder %s19, 5
      %p207 = pnand %p205, %p206
      %p208 = pneg %p207
      // Predicated region
      $region9: #{classical_model_forward.1} parent=5 // pred_check
        _
      $region10: #{classical_model_forward.1} parent=5 // pred_check_branch
        %210 = sbr.rel (%p207) target = $region12
      $region11: #{classical_model_forward.1} parent=5 // pred_region
        %s211 = ssub.s32 %s19, 1
        // Predicated region
        $region13: #{classical_model_forward.1} parent=11 // pred_check
          %p212 = pneg %p66
        $region14: #{classical_model_forward.1} parent=11 // pred_check_branch
          %214 = sbr.rel (%p212) target = $region16
        $region15: #{classical_model_forward.1} parent=11 // pred_region
          _
        $region16: #{classical_model_forward.1} parent=11 // pred_fallthru
          _
        // Predicated region
        $region17: #{classical_model_forward.1} parent=11 // pred_check
          %p215 = pneg %p87
        $region18: #{classical_model_forward.1} parent=11 // pred_check_branch
          %217 = sbr.rel (%p215) target = $region20
        $region19: #{classical_model_forward.1} parent=11 // pred_region
          _
        $region20: #{classical_model_forward.1} parent=11 // pred_fallthru
          _
        // Predicated region
        $region21: #{classical_model_forward.1} parent=11 // pred_check
          %p218 = pneg %p108
        $region22: #{classical_model_forward.1} parent=11 // pred_check_branch
          %220 = sbr.rel (%p218) target = $region24
        $region23: #{classical_model_forward.1} parent=11 // pred_region
          _
        $region24: #{classical_model_forward.1} parent=11 // pred_fallthru
          _
        // Predicated region
        $region25: #{classical_model_forward.1} parent=11 // pred_check
          %p221 = pneg %p129
        $region26: #{classical_model_forward.1} parent=11 // pred_check_branch
          %223 = sbr.rel (%p221) target = $region28
        $region27: #{classical_model_forward.1} parent=11 // pred_region
          _
        $region28: #{classical_model_forward.1} parent=11 // pred_fallthru
          _
        // Predicated region
        $region29: #{classical_model_forward.1} parent=11 // pred_check
          %p224 = pneg %p150
        $region30: #{classical_model_forward.1} parent=11 // pred_check_branch
          %226 = sbr.rel (%p224) target = $region32
        $region31: #{classical_model_forward.1} parent=11 // pred_region
          _
        $region32: #{classical_model_forward.1} parent=11 // pred_fallthru
          _
        // Predicated region
        $region33: #{classical_model_forward.1} parent=11 // pred_check
          %p227 = pneg %p171
        $region34: #{classical_model_forward.1} parent=11 // pred_check_branch
          %229 = sbr.rel (%p227) target = $region36
        $region35: #{classical_model_forward.1} parent=11 // pred_region
          _
        $region36: #{classical_model_forward.1} parent=11 // pred_fallthru
          _
      $region12: #{classical_model_forward.1} parent=5 // pred_fallthru
        _
      %p230 = scmp.lt.s32.totalorder %s19, 4
      // Predicated region
      $region37: #{classical_model_forward.1} parent=5 // pred_check
        %p231 = pneg %p230
      $region38: #{classical_model_forward.1} parent=5 // pred_check_branch
        %233 = sbr.rel (%p231) target = $region40
      $region39: #{classical_model_forward.1} parent=5 // pred_region
        // Predicated region
        $region41: #{classical_model_forward.1} parent=39 // pred_check
          %p234 = pneg %p39
        $region42: #{classical_model_forward.1} parent=39 // pred_check_branch
          %236 = sbr.rel (%p234) target = $region44
        $region43: #{classical_model_forward.1} parent=39 // pred_region
          %s237 = sand.u32 %s29, 1
          %s238 = scalar_lea.sflag [#allocation3], %s237
          %s239 = sand.u32 %s29, 1
          %s240 = smul.addr %s239, 8
          %s241 = scalar_lea.vmem [#allocation2], %s240
          %s243 = ssub.s32 128, 128
          %244 = vsyncadd %s238, %s243
          %s245 = smul.addr %s19, 128
          %s246 = scalar_lea.hbm %s0, %s245
          %s248 = sshll.u32 %s241, 4
          %s249 = int_to_ptr.vmem [resolvable:$true] %s248
          %251 = dma.hbm_to_vmem [thread:$0]  %s246, 128, %s249, %s238
        $region44: #{classical_model_forward.1} parent=39 // pred_fallthru
          _
      $region40: #{classical_model_forward.1} parent=5 // pred_fallthru
        _
      %p252 = scmp.le.s32.totalorder 1, %s19
      %p253 = scmp.lt.s32.totalorder %s19, 5
      %p254 = pnand %p252, %p253
      %p255 = pneg %p254
      // Predicated region
      $region45: #{classical_model_forward.1} parent=5 // pred_check
        _
      $region46: #{classical_model_forward.1} parent=5 // pred_check_branch
        %257 = sbr.rel (%p254) target = $region48
      $region47: #{classical_model_forward.1} parent=5 // pred_region
        %s258 = ssub.s32 %s19, 1
        %s259 = sand.u32 %s32, 1
        %s260 = scalar_lea.sflag [#allocation3], %s259
        %s261 = sand.u32 %s32, 1
        %s262 = smul.addr %s261, 8
        %s263 = scalar_lea.vmem [#allocation2], %s262
        // Predicated region
        $region49: #{classical_model_forward.1} parent=47 // pred_check
          %p264 = pneg %p45
        $region50: #{classical_model_forward.1} parent=47 // pred_check_branch
          %266 = sbr.rel (%p264) target = $region52
        $region51: #{classical_model_forward.1} parent=47 // pred_region
          %267 = dma.done %s260, 128
        $region52: #{classical_model_forward.1} parent=47 // pred_fallthru
          _
        %s268 = sand.u32 %s32, 1
        %s269 = scalar_lea.sflag [#allocation3], %s268
        %s270 = sand.u32 %s32, 1
        %s271 = smul.addr %s270, 8
        %s272 = scalar_lea.vmem [#allocation2], %s271
        %p273 = pneg %p45
        %p274 = pneg %p42
        %p275 = pneg %p66
        %p276 = pneg %p63
        %p277 = pneg %p87
        %p278 = pneg %p84
        %p279 = pneg %p108
        %p280 = pneg %p105
        %p281 = pneg %p129
        %p282 = pneg %p126
        %p283 = pneg %p150
        %p284 = pneg %p147
        %p285 = pneg %p171
        %p286 = pneg %p168
        %p287 = pneg %p197
        %p288 = pneg %p194
        %s289 = sand.u32 %s184, 1
        %s290 = scalar_lea.sflag [#allocation4], %s289
        %s291 = sand.u32 %s184, 1
        %s292 = smul.addr %s291, 2
        %s293 = scalar_lea.vmem [#allocation5], %s292
        %v294 = vld [vmem:[%s263] sm:$0xff]
        %v295 = vld [vmem:[%s1] sm:$0xff]
        %v296 = vld [vmem:[%s2] sm:$0xff]
        %298 = vset.pattern.permute.xlu0 0
        %299 = vperm.xlu0 %298, %v296
        %v300 = vpop.permute.xlu0 %299
        %vm302 = vcmask 64512
        %v304 = vsel %vm302, %v295, 0
        %306 = vmatprep.subr.mxu0 0.0
        %307 = vmatpush1.msra.mxu0 %v294
        %308 = vmatprep.subr.mxu0 0.0
        %309 = vmatpush1.msra.mxu0 0.0
        %310 = vmatprep.subr.mxu0 0.0
        %311 = vmatpush1.msra.mxu0 0.0
        %312 = vmatprep.subr.mxu0 0.0
        %313 = vmatpush1.msra.mxu0 0.0
        %314 = vmatprep.subr.mxu0 0.0
        %315 = vmatpush1.msra.mxu0 0.0
        %316 = vmatprep.subr.mxu0 0.0
        %317 = vmatpush1.msra.mxu0 0.0
        %318 = vmatprep.subr.mxu0 0.0
        %319 = vmatpush1.msra.mxu0 0.0
        %320 = vmatprep.subr.mxu0 0.0
        %321 = vmatpush1.msra.mxu0 0.0
        %322 = vmatprep.subr.mxu0 0.0
        %323 = vmatpush1.msra.mxu0 0.0
        %324 = vmatprep.subr.mxu0 0.0
        %325 = vmatpush1.msra.mxu0 0.0
        %326 = vmatprep.subr.mxu0 0.0
        %327 = vmatpush1.msra.mxu0 0.0
        %328 = vmatprep.subr.mxu0 0.0
        %329 = vmatpush1.msra.mxu0 0.0
        %330 = vmatprep.subr.mxu0 0.0
        %331 = vmatpush1.msra.mxu0 0.0
        %332 = vmatprep.subr.mxu0 0.0
        %333 = vmatpush1.msra.mxu0 0.0
        %334 = vmatprep.subr.mxu0 0.0
        %335 = vmatpush1.msra.mxu0 0.0
        %336 = vmatprep.subr.mxu0 0.0
        %337 = vmatpush1.msra.mxu0 0.0
        %338 = vmatprep.subr.mxu0 0.0
        %339 = vmatpush1.msra.mxu0 0.0
        %340 = vmatprep.subr.mxu0 0.0
        %341 = vmatpush1.msra.mxu0 0.0
        %342 = vmatprep.subr.mxu0 0.0
        %343 = vmatpush1.msra.mxu0 0.0
        %344 = vmatprep.subr.mxu0 0.0
        %345 = vmatpush1.msra.mxu0 0.0
        %346 = vmatprep.subr.mxu0 0.0
        %347 = vmatpush1.msra.mxu0 0.0
        %348 = vmatprep.subr.mxu0 0.0
        %349 = vmatpush1.msra.mxu0 0.0
        %350 = vmatprep.subr.mxu0 0.0
        %351 = vmatpush1.msra.mxu0 0.0
        %352 = vmatprep.subr.mxu0 0.0
        %353 = vmatpush1.msra.mxu0 0.0
        %354 = vmatprep.subr.mxu0 0.0
        %355 = vmatpush1.msra.mxu0 0.0
        %356 = vmatprep.subr.mxu0 0.0
        %357 = vmatpush1.msra.mxu0 0.0
        %358 = vmatprep.subr.mxu0 0.0
        %359 = vmatpush1.msra.mxu0 0.0
        %360 = vmatprep.subr.mxu0 0.0
        %361 = vmatpush1.msra.mxu0 0.0
        %362 = vmatprep.subr.mxu0 0.0
        %363 = vmatpush1.msra.mxu0 0.0
        %364 = vmatprep.subr.mxu0 0.0
        %365 = vmatpush1.msra.mxu0 0.0
        %366 = vmatprep.subr.mxu0 0.0
        %367 = vmatpush1.msra.mxu0 0.0
        %368 = vmatprep.subr.mxu0 0.0
        %369 = vmatpush1.msra.mxu0 0.0
        %370 = vmatprep.mubr.f32.mxu0 0.0
        %371 = vmatmul.mubr.f32.gmra.mrb[0].mxu0 %v304
        %v372 = vpop.f32.mrb[0].mxu0
        %v373 = vadd.f32 %v300, %v372
        %v374 = vpop.f32.mrb[0].mxu0
        %375 = vdwg.mxu0
        %v376 = vmax.f32 %v373, 0.0
        %v377 = vld [vmem:[%s3] sm:$0xff]
        %v378 = vld [vmem:[%s4] sm:$0xff]
        %380 = vset.pattern.permute.xlu0 0
        %381 = vperm.xlu0 %380, %v378
        %v382 = vpop.permute.xlu0 %381
        %v385 = vsel %vm302, %v377, 0
        %387 = vmatprep.subr.mxu0 0.0
        %388 = vmatpush1.msra.mxu0 %v376
        %389 = vmatprep.subr.mxu0 0.0
        %390 = vmatpush1.msra.mxu0 0.0
        %391 = vmatprep.subr.mxu0 0.0
        %392 = vmatpush1.msra.mxu0 0.0
        %393 = vmatprep.subr.mxu0 0.0
        %394 = vmatpush1.msra.mxu0 0.0
        %395 = vmatprep.subr.mxu0 0.0
        %396 = vmatpush1.msra.mxu0 0.0
        %397 = vmatprep.subr.mxu0 0.0
        %398 = vmatpush1.msra.mxu0 0.0
        %399 = vmatprep.subr.mxu0 0.0
        %400 = vmatpush1.msra.mxu0 0.0
        %401 = vmatprep.subr.mxu0 0.0
        %402 = vmatpush1.msra.mxu0 0.0
        %403 = vmatprep.subr.mxu0 0.0
        %404 = vmatpush1.msra.mxu0 0.0
        %405 = vmatprep.subr.mxu0 0.0
        %406 = vmatpush1.msra.mxu0 0.0
        %407 = vmatprep.subr.mxu0 0.0
        %408 = vmatpush1.msra.mxu0 0.0
        %409 = vmatprep.subr.mxu0 0.0
        %410 = vmatpush1.msra.mxu0 0.0
        %411 = vmatprep.subr.mxu0 0.0
        %412 = vmatpush1.msra.mxu0 0.0
        %413 = vmatprep.subr.mxu0 0.0
        %414 = vmatpush1.msra.mxu0 0.0
        %415 = vmatprep.subr.mxu0 0.0
        %416 = vmatpush1.msra.mxu0 0.0
        %417 = vmatprep.subr.mxu0 0.0
        %418 = vmatpush1.msra.mxu0 0.0
        %419 = vmatprep.subr.mxu0 0.0
        %420 = vmatpush1.msra.mxu0 0.0
        %421 = vmatprep.subr.mxu0 0.0
        %422 = vmatpush1.msra.mxu0 0.0
        %423 = vmatprep.subr.mxu0 0.0
        %424 = vmatpush1.msra.mxu0 0.0
        %425 = vmatprep.subr.mxu0 0.0
        %426 = vmatpush1.msra.mxu0 0.0
        %427 = vmatprep.subr.mxu0 0.0
        %428 = vmatpush1.msra.mxu0 0.0
        %429 = vmatprep.subr.mxu0 0.0
        %430 = vmatpush1.msra.mxu0 0.0
        %431 = vmatprep.subr.mxu0 0.0
        %432 = vmatpush1.msra.mxu0 0.0
        %433 = vmatprep.subr.mxu0 0.0
        %434 = vmatpush1.msra.mxu0 0.0
        %435 = vmatprep.subr.mxu0 0.0
        %436 = vmatpush1.msra.mxu0 0.0
        %437 = vmatprep.subr.mxu0 0.0
        %438 = vmatpush1.msra.mxu0 0.0
        %439 = vmatprep.subr.mxu0 0.0
        %440 = vmatpush1.msra.mxu0 0.0
        %441 = vmatprep.subr.mxu0 0.0
        %442 = vmatpush1.msra.mxu0 0.0
        %443 = vmatprep.subr.mxu0 0.0
        %444 = vmatpush1.msra.mxu0 0.0
        %445 = vmatprep.subr.mxu0 0.0
        %446 = vmatpush1.msra.mxu0 0.0
        %447 = vmatprep.subr.mxu0 0.0
        %448 = vmatpush1.msra.mxu0 0.0
        %449 = vmatprep.subr.mxu0 0.0
        %450 = vmatpush1.msra.mxu0 0.0
        %451 = vmatprep.mubr.f32.mxu0 0.0
        %452 = vmatmul.mubr.f32.gmra.mrb[0].mxu0 %v385
        %v453 = vpop.f32.mrb[0].mxu0
        %v454 = vadd.f32 %v382, %v453
        %v455 = vpop.f32.mrb[0].mxu0
        %456 = vdwg.mxu0
        %v457 = vmax.f32 %v454, 0.0
        %v458 = vld [vmem:[%s5] sm:$0x3]
        %v459 = vld [vmem:[%s6] sm:$0x3]
        %461 = vset.pattern.permute.xlu0 0
        %462 = vperm.xlu0 %461, %v459
        %v463 = vpop.permute.xlu0 %462
        %v466 = vsel %vm302, %v458, 0
        %468 = vmatprep.subr.mxu0 0.0
        %469 = vmatpush1.msra.mxu0 %v457
        %470 = vmatprep.subr.mxu0 0.0
        %471 = vmatpush1.msra.mxu0 0.0
        %472 = vmatprep.subr.mxu0 0.0
        %473 = vmatpush1.msra.mxu0 0.0
        %474 = vmatprep.subr.mxu0 0.0
        %475 = vmatpush1.msra.mxu0 0.0
        %476 = vmatprep.subr.mxu0 0.0
        %477 = vmatpush1.msra.mxu0 0.0
        %478 = vmatprep.subr.mxu0 0.0
        %479 = vmatpush1.msra.mxu0 0.0
        %480 = vmatprep.subr.mxu0 0.0
        %481 = vmatpush1.msra.mxu0 0.0
        %482 = vmatprep.subr.mxu0 0.0
        %483 = vmatpush1.msra.mxu0 0.0
        %484 = vmatprep.subr.mxu0 0.0
        %485 = vmatpush1.msra.mxu0 0.0
        %486 = vmatprep.subr.mxu0 0.0
        %487 = vmatpush1.msra.mxu0 0.0
        %488 = vmatprep.subr.mxu0 0.0
        %489 = vmatpush1.msra.mxu0 0.0
        %490 = vmatprep.subr.mxu0 0.0
        %491 = vmatpush1.msra.mxu0 0.0
        %492 = vmatprep.subr.mxu0 0.0
        %493 = vmatpush1.msra.mxu0 0.0
        %494 = vmatprep.subr.mxu0 0.0
        %495 = vmatpush1.msra.mxu0 0.0
        %496 = vmatprep.subr.mxu0 0.0
        %497 = vmatpush1.msra.mxu0 0.0
        %498 = vmatprep.subr.mxu0 0.0
        %499 = vmatpush1.msra.mxu0 0.0
        %500 = vmatprep.subr.mxu0 0.0
        %501 = vmatpush1.msra.mxu0 0.0
        %502 = vmatprep.subr.mxu0 0.0
        %503 = vmatpush1.msra.mxu0 0.0
        %504 = vmatprep.subr.mxu0 0.0
        %505 = vmatpush1.msra.mxu0 0.0
        %506 = vmatprep.subr.mxu0 0.0
        %507 = vmatpush1.msra.mxu0 0.0
        %508 = vmatprep.subr.mxu0 0.0
        %509 = vmatpush1.msra.mxu0 0.0
        %510 = vmatprep.subr.mxu0 0.0
        %511 = vmatpush1.msra.mxu0 0.0
        %512 = vmatprep.subr.mxu0 0.0
        %513 = vmatpush1.msra.mxu0 0.0
        %514 = vmatprep.subr.mxu0 0.0
        %515 = vmatpush1.msra.mxu0 0.0
        %516 = vmatprep.subr.mxu0 0.0
        %517 = vmatpush1.msra.mxu0 0.0
        %518 = vmatprep.subr.mxu0 0.0
        %519 = vmatpush1.msra.mxu0 0.0
        %520 = vmatprep.subr.mxu0 0.0
        %521 = vmatpush1.msra.mxu0 0.0
        %522 = vmatprep.subr.mxu0 0.0
        %523 = vmatpush1.msra.mxu0 0.0
        %524 = vmatprep.subr.mxu0 0.0
        %525 = vmatpush1.msra.mxu0 0.0
        %526 = vmatprep.subr.mxu0 0.0
        %527 = vmatpush1.msra.mxu0 0.0
        %528 = vmatprep.subr.mxu0 0.0
        %529 = vmatpush1.msra.mxu0 0.0
        %530 = vmatprep.subr.mxu0 0.0
        %531 = vmatpush1.msra.mxu0 0.0
        %532 = vmatprep.mubr.f32.mxu0 0.0
        %533 = vmatmul.mubr.f32.gmra.mrb[0].mxu0 %v466
        %v534 = vpop.f32.mrb[0].mxu0
        %v535 = vadd.f32 %v463, %v534
        %v536 = vpop.f32.mrb[0].mxu0
        %537 = vdwg.mxu0
        %538 = vst [vmem:[%s293] sm:$0x3] %v535
        %s539 = sand.u32 %s184, 1
        %s540 = scalar_lea.sflag [#allocation4], %s539
        %s541 = sand.u32 %s184, 1
        %s542 = smul.addr %s541, 2
        %s543 = scalar_lea.vmem [#allocation5], %s542
        // Predicated region
        $region53: #{classical_model_forward.1} parent=47 // pred_check
          %p544 = pneg %p194
        $region54: #{classical_model_forward.1} parent=47 // pred_check_branch
          %546 = sbr.rel (%p544) target = $region56
        $region55: #{classical_model_forward.1} parent=47 // pred_region
          %s548 = ssub.s32 32, 32
          %549 = vsyncadd %s540, %s548
          %s550 = smul.addr %s24, 32
          %s551 = scalar_lea.hbm %s7, %s550
          %s553 = sshll.u32 %s543, 4
          %s554 = int_to_ptr.vmem [resolvable:$true] %s553
          %556 = dma.vmem_to_hbm [thread:$0]  %s554, 32, %s551, %s540
        $region56: #{classical_model_forward.1} parent=47 // pred_fallthru
          _
      $region48: #{classical_model_forward.1} parent=5 // pred_fallthru
        _
      %p557 = scmp.le.s32.totalorder 2, %s19
      // Predicated region
      $region57: #{classical_model_forward.1} parent=5 // pred_check
        %p558 = pneg %p557
      $region58: #{classical_model_forward.1} parent=5 // pred_check_branch
        %560 = sbr.rel (%p558) target = $region60
      $region59: #{classical_model_forward.1} parent=5 // pred_region
        %s561 = ssub.s32 %s19, 2
        // Predicated region
        $region61: #{classical_model_forward.1} parent=59 // pred_check
          %p562 = pneg %p200
        $region62: #{classical_model_forward.1} parent=59 // pred_check_branch
          %564 = sbr.rel (%p562) target = $region64
        $region63: #{classical_model_forward.1} parent=59 // pred_region
          %s565 = sand.u32 %s185, 1
          %s566 = scalar_lea.sflag [#allocation4], %s565
          %s567 = sand.u32 %s185, 1
          %s568 = smul.addr %s567, 2
          %s569 = scalar_lea.vmem [#allocation5], %s568
          %570 = dma.done %s566, 32
        $region64: #{classical_model_forward.1} parent=59 // pred_fallthru
          _
      $region60: #{classical_model_forward.1} parent=5 // pred_fallthru
        _
    $region6: #{classical_model_forward.1} parent=1 // loop_footer
      %s23 = sadd.s32 1, %s19
    $region7: #{classical_model_forward.1} parent=1 // loop_footer_branch
      %18 = sbr.rel target = $region3
    $region8: #{classical_model_forward.1} parent=1 // loop_exit
      _
    %571 = vsyncpa [#allocation3], 1
    %s572 = scalar_lea.sflag [#allocation3], 1
    %573 = vsyncpa %s572, 1
    %574 = vsyncpa [#allocation4], 1
    %s575 = scalar_lea.sflag [#allocation4], 1
    %576 = vsyncpa %s575, 1

</llo_original>
